<compile_context>
chip_gen: v6e
topology: v6e:2x2x1
jax: 0.10.0
libtpu: 0.0.40
codegen_flags: <defaults>
</compile_context>

<pallas_src>
import functools

import jax
import jax.numpy as jnp
from jax import lax
from jax.experimental import pallas as pl
from jax.experimental.pallas import tpu as pltpu

_CHUNK = 128  # lane-chunk for the blocked cumulative sum (one vreg column group)


def _softmax_body_kernel(x_ref, u_ref, a_ref, *, T: float):
    # x_ref: (TB, N) logits block, u_ref: (TB, 1) uniforms, a_ref: (TB, 1) int32.
    x = x_ref[...].astype(jnp.float32)
    tb, n = x.shape

    if T > 0.0:
        # Fold the temperature into the exponent (valid for T > 0): saves a full
        # (TB, N) multiply. max(x) is a valid stability shift for the scaled logits.
        m = jnp.max(x, axis=-1, keepdims=True)
        e = jnp.exp((x - m) * T)
    else:
        # General path (T <= 0): scale first, then stabilize.
        xt = x * T
        m = jnp.max(xt, axis=-1, keepdims=True)
        e = jnp.exp(xt - m)

    denom = jnp.sum(e, axis=-1, keepdims=True)            # (TB, 1) = sum_k e_k
    thresh = u_ref[...].astype(jnp.float32) * denom        # compare unnormalized cumsum vs u*denom

    # Blocked inclusive prefix sum + count, 128 lanes at a time:
    #   cum[j] = carry + sum_{k<=j within chunk} e[k];  count += #(cum < thresh)
    tri_cache = {}

    def _tri(w):
        if w not in tri_cache:
            r = lax.broadcasted_iota(jnp.int32, (w, w), 0)
            c = lax.broadcasted_iota(jnp.int32, (w, w), 1)
            tri_cache[w] = (r <= c).astype(jnp.float32)
        return tri_cache[w]

    count = jnp.zeros((tb, 1), dtype=jnp.int32)
    carry = jnp.zeros((tb, 1), dtype=jnp.float32)
    for start in range(0, n, _CHUNK):
        width = min(_CHUNK, n - start)
        e_c = e if width == n else e[:, start:start + width]      # aligned static slice
        cum_c = jnp.dot(e_c, _tri(width), preferred_element_type=jnp.float32) + carry
        count = count + jnp.sum((cum_c < thresh).astype(jnp.int32),
                                axis=-1, keepdims=True)
        if start + _CHUNK < n:                                    # carry for next chunk
            carry = carry + jnp.sum(e_c, axis=-1, keepdims=True)

    a_ref[...] = jnp.minimum(count, n - 1).astype(jnp.int32)


def _pick_tile_rows(batch: int, num_actions: int) -> int:
    """Rows per grid step: big enough to pipeline well, small enough for v7x VMEM."""
    row_bytes = 4 * max(num_actions, 1)
    cap = (2 * 1024 * 1024) // row_bytes          # ~2 MiB per (double-buffered) input block
    cap = max(8, (cap // 8) * 8)                  # keep the sublane-divisibility rule
    tile = min(512, cap)
    return batch if batch <= tile else tile       # full-array block is always legal


def softmax_body(outputs: jax.Array, u: jax.Array, T: float, *,
                 tile_rows: int | None = None) -> jax.Array:
    """outputs: (B, N) logits; u: (B, 1) uniforms in [0,1); returns (B, 1) int32 actions."""
    B, N = outputs.shape
    tb = _pick_tile_rows(B, N) if tile_rows is None else tile_rows
    kernel = functools.partial(_softmax_body_kernel, T=float(T))
    return pl.pallas_call(
        kernel,
        out_shape=jax.ShapeDtypeStruct((B, 1), jnp.int32),
        grid=(pl.cdiv(B, tb),),
        in_specs=[
            pl.BlockSpec((tb, N), lambda i: (i, 0)),
            pl.BlockSpec((tb, 1), lambda i: (i, 0)),
        ],
        out_specs=pl.BlockSpec((tb, 1), lambda i: (i, 0)),
        compiler_params=pltpu.CompilerParams(
            dimension_semantics=("parallel",),     # batch rows shard across v7x's 2 TCs
        ),
    )(outputs, u)


def softmax_body_ref(outputs: jax.Array, u: jax.Array, T: float) -> jax.Array:
    """Pure-JAX reference: inverse-CDF multinomial sample of softmax(outputs*T)."""
    x = outputs.astype(jnp.float32)
    T = float(T)
    if T > 0.0:
        m = jnp.max(x, axis=-1, keepdims=True)
        e = jnp.exp((x - m) * T)
    else:
        xt = x * T
        m = jnp.max(xt, axis=-1, keepdims=True)
        e = jnp.exp(xt - m)
    denom = jnp.sum(e, axis=-1, keepdims=True)
    cum = jnp.cumsum(e, axis=-1)
    idx = jnp.sum((cum < u * denom).astype(jnp.int32), axis=-1, keepdims=True)
    return jnp.minimum(idx, outputs.shape[-1] - 1).astype(jnp.int32)


if __name__ == "__main__":
    key = jax.random.PRNGKey(0)
    k_x, k_u, k_x2, k_u2 = jax.random.split(key, 4)
    T = 7.0

    # --- small shape matching the module's intended use (B brain outputs, N actions) ---
    B, N = 8, 16
    outputs = jax.random.normal(k_x, (B, N), dtype=jnp.float32)
    u = jax.random.uniform(k_u, (B, 1), dtype=jnp.float32)

    actions = jax.block_until_ready(softmax_body(outputs, u, T))
    expected = softmax_body_ref(outputs, u, T)

    assert actions.shape == (B, 1), actions.shape
    assert actions.dtype == jnp.int32, actions.dtype
    assert bool(jnp.all((actions >= 0) & (actions < N)))
    assert bool(jnp.all(actions == expected)), (actions, expected)

    # --- slightly larger shape exercising the batch grid + chunked cumulative sum ---
    B2, N2 = 96, 272
    outputs2 = jax.random.normal(k_x2, (B2, N2), dtype=jnp.float32)
    u2 = jax.random.uniform(k_u2, (B2, 1), dtype=jnp.float32)

    actions2 = jax.block_until_ready(softmax_body(outputs2, u2, T, tile_rows=32))
    expected2 = softmax_body_ref(outputs2, u2, T)

    assert actions2.shape == (B2, 1)
    assert bool(jnp.all((actions2 >= 0) & (actions2 < N2)))
    # Blocked MXU accumulation order differs from jnp.cumsum; allow rare +-1 boundary ties.
    diff = jnp.abs(actions2 - expected2)
    assert bool(jnp.all(diff <= 1))
    assert float(jnp.mean((diff == 0).astype(jnp.float32))) > 0.9

    print("KERNEL_OK")
</pallas_src>

<mosaic_0001>
module attributes {stable_mosaic.version = 11 : i64} {
  func.func @_softmax_body_kernel(%arg0: i32, %arg1: memref<8x16xf32, #tpu.memory_space<vmem>>, %arg2: memref<8x1xf32, #tpu.memory_space<vmem>>, %arg3: memref<8x1xi32, #tpu.memory_space<vmem>>) attributes {dimension_semantics = [#tpu.dimension_semantics<parallel>], iteration_bounds = array<i64: 1>, scalar_prefetch = 0 : i64, scratch_operands = 0 : i64, tpu.core_type = #tpu.core_type<tc>, window_params = [{transform_indices = @transform_0, window_bounds = array<i64: 8, 16>}, {transform_indices = @transform_1, window_bounds = array<i64: 8, 1>}, {transform_indices = @transform_2, window_bounds = array<i64: 8, 1>}]} {
    %c0 = arith.constant 0 : index
    %c0_0 = arith.constant 0 : index
    %0 = vector.load %arg1[%c0, %c0_0] : memref<8x16xf32, #tpu.memory_space<vmem>>, vector<8x16xf32>
    %cst = arith.constant dense<0xFF800000> : vector<8xf32>
    %1 = vector.multi_reduction <maximumf>, %0, %cst [1] : vector<8x16xf32> to vector<8xf32>
    %2 = vector.shape_cast %1 : vector<8xf32> to vector<8x1xf32>
    %3 = vector.broadcast %2 : vector<8x1xf32> to vector<8x16xf32>
    %4 = arith.subf %0, %3 : vector<8x16xf32>
    %cst_1 = arith.constant 7.000000e+00 : f32
    %5 = vector.broadcast %cst_1 : f32 to vector<8x16xf32>
    %6 = arith.mulf %4, %5 : vector<8x16xf32>
    %7 = math.exp %6 : vector<8x16xf32>
    %cst_2 = arith.constant dense<0.000000e+00> : vector<8xf32>
    %8 = vector.multi_reduction <add>, %7, %cst_2 [1] : vector<8x16xf32> to vector<8xf32>
    %9 = vector.shape_cast %8 : vector<8xf32> to vector<8x1xf32>
    %c0_3 = arith.constant 0 : index
    %c0_4 = arith.constant 0 : index
    %10 = vector.load %arg2[%c0_3, %c0_4] : memref<8x1xf32, #tpu.memory_space<vmem>>, vector<8x1xf32>
    %11 = arith.mulf %10, %9 : vector<8x1xf32>
    %c0_i32 = arith.constant 0 : i32
    %12 = vector.broadcast %c0_i32 : i32 to vector<8x1xi32>
    %cst_5 = arith.constant 0.000000e+00 : f32
    %13 = vector.broadcast %cst_5 : f32 to vector<8x1xf32>
    %14 = tpu.iota {dimensions = array<i32: 0>} : vector<16x16xi32>
    %15 = tpu.iota {dimensions = array<i32: 1>} : vector<16x16xi32>
    %16 = arith.cmpi sle, %14, %15 : vector<16x16xi32>
    %17 = arith.extui %16 : vector<16x16xi1> to vector<16x16xi32>
    %18 = arith.sitofp %17 : vector<16x16xi32> to vector<16x16xf32>
    %cst_6 = arith.constant dense<0.000000e+00> : vector<8x16xf32>
    %19 = tpu.matmul %7, %18, %cst_6 {dimension_numbers = #tpu.dot_dimension_numbers<[1], [0], [0], [1], [0, 0, 1, 1], [], []>} : vector<8x16xf32>, vector<16x16xf32>, vector<8x16xf32> -> vector<8x16xf32>
    %20 = vector.broadcast %13 : vector<8x1xf32> to vector<8x16xf32>
    %21 = arith.addf %19, %20 : vector<8x16xf32>
    %22 = vector.broadcast %11 : vector<8x1xf32> to vector<8x16xf32>
    %23 = arith.cmpf olt, %21, %22 : vector<8x16xf32>
    %24 = arith.extui %23 : vector<8x16xi1> to vector<8x16xi32>
    %cst_7 = arith.constant dense<0> : vector<8xi32>
    %25 = vector.multi_reduction <add>, %24, %cst_7 [1] : vector<8x16xi32> to vector<8xi32>
    %26 = vector.shape_cast %25 : vector<8xi32> to vector<8x1xi32>
    %27 = arith.addi %12, %26 : vector<8x1xi32>
    %c15_i32 = arith.constant 15 : i32
    %28 = vector.broadcast %c15_i32 : i32 to vector<8x1xi32>
    %29 = arith.minsi %27, %28 : vector<8x1xi32>
    %c0_8 = arith.constant 0 : index
    %c0_9 = arith.constant 0 : index
    %30 = vector.load %arg3[%c0_8, %c0_9] : memref<8x1xi32, #tpu.memory_space<vmem>>, vector<8x1xi32>
    tpu.vector_store %arg3[%c0_8, %c0_9], %29 {strides = array<i32>} : memref<8x1xi32, #tpu.memory_space<vmem>>, vector<8x1xi32>,
    return
  }
  func.func @transform_0(%arg0: i32) -> (i32, i32) {
    %c0_i32 = arith.constant 0 : i32
    %c0_i32_0 = arith.constant 0 : i32
    return %arg0, %c0_i32 : i32, i32
  }
  func.func @transform_1(%arg0: i32) -> (i32, i32) {
    %c0_i32 = arith.constant 0 : i32
    %c0_i32_0 = arith.constant 0 : i32
    return %arg0, %c0_i32 : i32, i32
  }
  func.func @transform_2(%arg0: i32) -> (i32, i32) {
    %c0_i32 = arith.constant 0 : i32
    %c0_i32_0 = arith.constant 0 : i32
    return %arg0, %c0_i32 : i32, i32
  }
}

</mosaic_0001>

<llo_original>
// kernel: tpu_custom_call.1
$region0: #{tpu_custom_call.1}
  #allocation0 [shape = 'u32[]', space=smem, size = 0x4, offset = 0x4, fixed_abs, tag = 'smem constant byte address 0x4 - core index']
  #allocation1 [shape = 'u32[144,128]{1,0:T(1,128)}', space=vmem, size = 0x12000, scoped, tag = 'internal scratch']
  %s0 = inlined_call_operand.vmem [shape: f32[8,16], index: 0, kind: input, shape index: {}]
  %s1 = inlined_call_operand.vmem [shape: f32[8,1], index: 1, kind: input, shape index: {}]
  %s2 = inlined_call_operand.vmem [shape: s32[8,1], index: 2, kind: output, shape index: {}]
  %s3 = sld [smem:[#allocation0]]
  $region18: #{tpu_custom_call.1} parent=0
    _
  %s5 = ssub.s32 1, %s3
  %s6 = scalar_select 0, %s5, %s3
  // Predicated region
  $region2: #{tpu_custom_call.1} parent=0 // pred_check
    _
  $region3: #{tpu_custom_call.1} parent=0 // pred_check_branch
    %8 = sbr.rel (0) target = $region5
  $region4: #{tpu_custom_call.1} parent=0 // pred_region
    _
  $region5: #{tpu_custom_call.1} parent=0 // pred_fallthru
    _
  // Predicated region
  $region6: #{tpu_custom_call.1} parent=0 // pred_check
    _
  $region7: #{tpu_custom_call.1} parent=0 // pred_check_branch
    %10 = sbr.rel (0) target = $region9
  $region8: #{tpu_custom_call.1} parent=0 // pred_region
    _
  $region9: #{tpu_custom_call.1} parent=0 // pred_fallthru
    _
  %v11 = vld [vmem:[%s0] sm:$0xff]
  %vm12 = vcmask 130048
  %v13 = vsel %vm12, %v11, -inf
  %14 = vmax.xlane.f32.xlu0 %v13
  %v15 = vpop.xlane.xlu0 %14
  %v16 = vsub.f32 %v11, %v15
  %v17 = vmul.f32 %v16, 7.0
  %v18 = vmul.f32 %v17, 1.442695
  %v19 = vpow.pop %v18
  %v20 = vsel %vm12, %v19, 0.0
  %21 = vadd.xlane.f32.xlu0 %v20
  %v22 = vpop.xlane.xlu0 %21
  %v23 = vld [vmem:[%s1] sm:$0xff]
  %v24 = vmul.f32 %v23, %v22
  %v25 = vlaneseq
  %v26 = vshrl.u32 %v25, 7
  %v27 = vadd.s32 %v26, 8
  %v28 = vlaneseq
  %v29 = vand.u32 %v28, 127
  %vm30 = vcmp.le.s32.totalorder %v26, %v29
  %vm31 = vcmp.le.s32.totalorder %v27, %v29
  %v32 = vsel %vm30, 1, 0
  %v33 = vsel %vm31, 1, 0
  %v34 = vcvt.s32.f32 %v32
  %v35 = vcvt.s32.f32 %v33
  %v37 = vsel %vm12, %v19, 0
  %39 = vmatprep.subr.mxu0 0.0
  %40 = vmatpush1.msra.mxu0 0.0
  %41 = vmatprep.subr.mxu0 0.0
  %42 = vmatpush1.msra.mxu0 0.0
  %43 = vmatprep.subr.mxu0 0.0
  %44 = vmatpush1.msra.mxu0 0.0
  %45 = vmatprep.subr.mxu0 0.0
  %46 = vmatpush1.msra.mxu0 0.0
  %47 = vmatprep.subr.mxu0 0.0
  %48 = vmatpush1.msra.mxu0 0.0
  %49 = vmatprep.subr.mxu0 0.0
  %50 = vmatpush1.msra.mxu0 0.0
  %51 = vmatprep.subr.mxu0 0.0
  %52 = vmatpush1.msra.mxu0 0.0
  %53 = vmatprep.subr.mxu0 0.0
  %54 = vmatpush1.msra.mxu0 0.0
  %55 = vmatprep.subr.mxu0 0.0
  %56 = vmatpush1.msra.mxu0 0.0
  %57 = vmatprep.subr.mxu0 0.0
  %58 = vmatpush1.msra.mxu0 0.0
  %59 = vmatprep.subr.mxu0 0.0
  %60 = vmatpush1.msra.mxu0 0.0
  %61 = vmatprep.subr.mxu0 0.0
  %62 = vmatpush1.msra.mxu0 0.0
  %63 = vmatprep.subr.mxu0 0.0
  %64 = vmatpush1.msra.mxu0 0.0
  %65 = vmatprep.subr.mxu0 0.0
  %66 = vmatpush1.msra.mxu0 0.0
  %67 = vmatprep.subr.mxu0 0.0
  %68 = vmatpush1.msra.mxu0 %v35
  %69 = vmatprep.subr.mxu0 0.0
  %70 = vmatpush1.msra.mxu0 %v34
  %71 = vmatprep.subr.mxu0 0.0
  %72 = vmatpush2.msra.mxu0 0.0
  %73 = vmatprep.subr.mxu0 0.0
  %74 = vmatpush2.msra.mxu0 0.0
  %75 = vmatprep.subr.mxu0 0.0
  %76 = vmatpush2.msra.mxu0 0.0
  %77 = vmatprep.subr.mxu0 0.0
  %78 = vmatpush2.msra.mxu0 0.0
  %79 = vmatprep.subr.mxu0 0.0
  %80 = vmatpush2.msra.mxu0 0.0
  %81 = vmatprep.subr.mxu0 0.0
  %82 = vmatpush2.msra.mxu0 0.0
  %83 = vmatprep.subr.mxu0 0.0
  %84 = vmatpush2.msra.mxu0 0.0
  %85 = vmatprep.subr.mxu0 0.0
  %86 = vmatpush2.msra.mxu0 0.0
  %87 = vmatprep.subr.mxu0 0.0
  %88 = vmatpush2.msra.mxu0 0.0
  %89 = vmatprep.subr.mxu0 0.0
  %90 = vmatpush2.msra.mxu0 0.0
  %91 = vmatprep.subr.mxu0 0.0
  %92 = vmatpush2.msra.mxu0 0.0
  %93 = vmatprep.subr.mxu0 0.0
  %94 = vmatpush2.msra.mxu0 0.0
  %95 = vmatprep.subr.mxu0 0.0
  %96 = vmatpush2.msra.mxu0 0.0
  %97 = vmatprep.subr.mxu0 0.0
  %98 = vmatpush2.msra.mxu0 0.0
  %99 = vmatprep.subr.mxu0 0.0
  %100 = vmatpush2.msra.mxu0 0.0
  %101 = vmatprep.subr.mxu0 0.0
  %102 = vmatpush2.msra.mxu0 0.0
  %103 = vmatprep.mubr.f32.mxu0 0.0
  %104 = vmatmul.mubr.f32.gmra.mxu0 %v37
  %v105 = vpop.f32.mrf.mxu0
  %v106 = vadd.f32 0.0, %v105
  %v107 = vpop.f32.mrf.mxu0
  %108 = vdwg.mxu0
  %110 = vset.pattern.permute.xlu0 0
  %111 = vperm.xlu0 %110, %v24
  %v112 = vpop.permute.xlu0 %111
  %vm114 = vcmp.lt.f32.partialorder %v106, %v112
  %v115 = vsel %vm114, 1, 0
  %v116 = vsel %vm12, %v115, 0
  %v117 = vand.u32 %v116, 65535
  %v118 = vshrl.u32 %v116, 16
  %v119 = vcvt.s32.f32 %v117
  %v120 = vcvt.s32.f32 %v118
  %121 = vadd.xlane.f32.xlu0 %v119
  %v122 = vpop.xlane.xlu0 %121
  %123 = vadd.xlane.f32.xlu0 %v120
  %v124 = vpop.xlane.xlu0 %123
  %v125 = vcvt.f32.s32 %v122
  %v126 = vcvt.f32.s32 %v124
  %v127 = vshll.u32 %v126, 16
  %v128 = vadd.s32 %v127, %v125
  %vm129 = vcmp.lt.s32.totalorder %v128, 15
  %v130 = vsel %vm129, %v128, 15
  %vm131 = vcmask 7168
  %132 = vst.msk [vmem:[%s2] sm:$0xff] %vm131, %v130
  // Predicated region
  $region10: #{tpu_custom_call.1} parent=0 // pred_check
    _
  $region11: #{tpu_custom_call.1} parent=0 // pred_check_branch
    %134 = sbr.rel (0) target = $region13
  $region12: #{tpu_custom_call.1} parent=0 // pred_region
    _
  $region13: #{tpu_custom_call.1} parent=0 // pred_fallthru
    _
  // Predicated region
  $region14: #{tpu_custom_call.1} parent=0 // pred_check
    _
  $region15: #{tpu_custom_call.1} parent=0 // pred_check_branch
    %136 = sbr.rel (0) target = $region17
  $region16: #{tpu_custom_call.1} parent=0 // pred_region
    _
  $region17: #{tpu_custom_call.1} parent=0 // pred_fallthru
    _

</llo_original>
